<compile_context>
chip_gen: v6e
topology: v6e:2x2x1
jax: 0.10.0
libtpu: 0.0.40
codegen_flags: <defaults>
</compile_context>

<pallas_src>
import functools

import jax
import jax.numpy as jnp
from jax.experimental import pallas as pl
from jax.experimental.pallas import tpu as pltpu


def _concat_kernel(*refs, channel_offsets, channel_sizes):
    """Copy each input tile into its channel slab of the output tile.

    refs = (x0_ref, x1_ref, ..., x{k-1}_ref, out_ref)
    Each input ref has block shape (1, C_i, hw_tile); output has (1, sum(C_i), hw_tile).
    Pure lane-dense VMEM copies, no compute.
    """
    out_ref = refs[-1]
    in_refs = refs[:-1]
    for x_ref, off, c in zip(in_refs, channel_offsets, channel_sizes):
        out_ref[:, off:off + c, :] = x_ref[...]


def concat_channels(xs, *, vmem_budget_bytes=12 * 1024 * 1024):
    """Concatenate a list of NCHW arrays along axis=1 using a Pallas kernel.

    All inputs must share N, H, W and dtype (matching torch.cat semantics for
    the common YOLO use-case).
    """
    assert len(xs) >= 1
    n, _, h, w = xs[0].shape
    dtype = xs[0].dtype
    for x in xs:
        assert x.shape[0] == n and x.shape[2] == h and x.shape[3] == w
        assert x.dtype == dtype

    channels = [int(x.shape[1]) for x in xs]
    offsets = []
    acc = 0
    for c in channels:
        offsets.append(acc)
        acc += c
    c_total = acc

    hw = h * w
    itemsize = jnp.dtype(dtype).itemsize

    # Per-spatial-element VMEM cost of one grid step, double-buffered:
    #   2 * (sum of input tiles) + 2 * (output tile) = 4 * C_total * itemsize.
    # Pick the largest lane-aligned (multiple of 128) spatial tile that fits the
    # budget; this keeps DMA bursts long while staying well inside scoped VMEM on
    # every generation (incl. v7x's 64 MiB physical / 32 MiB scoped default).
    bytes_per_hw = 4 * c_total * itemsize
    max_tile = max(128, (vmem_budget_bytes // bytes_per_hw) // 128 * 128)
    if hw <= max_tile:
        hw_tile = hw                      # full spatial extent -> single block
        num_hw_blocks = 1
    else:
        hw_tile = max_tile                # multiple of 128; partial last block is masked
        num_hw_blocks = pl.cdiv(hw, hw_tile)

    kernel = functools.partial(
        _concat_kernel,
        channel_offsets=tuple(offsets),
        channel_sizes=tuple(channels),
    )

    # Zero-copy row-major views: (N, C, H, W) -> (N, C, H*W). Last dim is lane-dense.
    xs_flat = [x.reshape(n, c, hw) for x, c in zip(xs, channels)]

    # Channel dim is the full array extent for every block, so the (8, 128)
    # constraint is satisfied regardless of C_i; the spatial tile is 128-aligned
    # (or the full extent).
    in_specs = [
        pl.BlockSpec((1, c, hw_tile), lambda b, j: (b, 0, j)) for c in channels
    ]
    out_spec = pl.BlockSpec((1, c_total, hw_tile), lambda b, j: (b, 0, j))

    out_flat = pl.pallas_call(
        kernel,
        out_shape=jax.ShapeDtypeStruct((n, c_total, hw), dtype),
        grid_spec=pltpu.PrefetchScalarGridSpec(
            num_scalar_prefetch=0,
            grid=(n, num_hw_blocks),
            in_specs=in_specs,
            out_specs=out_spec,
        ),
        compiler_params=pltpu.CompilerParams(
            # Every block is independent (pure copy) -> both axes parallel so
            # v7x's two TensorCores are used even with N == 1.
            dimension_semantics=("parallel", "parallel"),
            vmem_limit_bytes=32 * 1024 * 1024,
        ),
    )(*xs_flat)

    return out_flat.reshape(n, c_total, h, w)


class Concat:
    """JAX/Pallas equivalent of the PyTorch Concat module (dimension=1)."""

    def __init__(self, dimension=1):
        # TODO(synk): only channel-dim (NCHW dim=1) concat is implemented; other
        # dims would just need a different axis flattening.
        assert dimension == 1, "kernel implements channel-dim concat (NCHW dim=1)"
        self.d = dimension

    def __call__(self, x):
        return concat_channels(x)


if __name__ == "__main__":
    key = jax.random.PRNGKey(0)
    k1, k2, k3 = jax.random.split(key, 3)

    # Small NCHW inputs, as produced by upstream conv blocks in YOLO.
    x1 = jax.random.normal(k1, (2, 4, 16, 16), dtype=jnp.float32)
    x2 = jax.random.normal(k2, (2, 8, 16, 16), dtype=jnp.float32)
    x3 = jax.random.normal(k3, (2, 4, 16, 16), dtype=jnp.float32)

    module = Concat(dimension=1)
    out = module([x1, x2, x3])
    out = jax.block_until_ready(out)

    ref = jnp.concatenate([x1, x2, x3], axis=1)
    assert out.shape == (2, 16, 16, 16), out.shape
    assert jnp.array_equal(out, ref), "mismatch vs jnp.concatenate reference"

    print("KERNEL_OK")
</pallas_src>

<mosaic_0001>
module attributes {stable_mosaic.version = 11 : i64} {
  func.func @_concat_kernel(%arg0: i32, %arg1: i32, %arg2: memref<1x4x256xf32, #tpu.memory_space<vmem>>, %arg3: memref<1x8x256xf32, #tpu.memory_space<vmem>>, %arg4: memref<1x4x256xf32, #tpu.memory_space<vmem>>, %arg5: memref<1x16x256xf32, #tpu.memory_space<vmem>>) attributes {dimension_semantics = [#tpu.dimension_semantics<parallel>, #tpu.dimension_semantics<parallel>], iteration_bounds = array<i64: 2, 1>, scalar_prefetch = 0 : i64, scratch_operands = 0 : i64, tpu.core_type = #tpu.core_type<tc>, window_params = [{transform_indices = @transform_0, window_bounds = array<i64: 1, 4, 256>}, {transform_indices = @transform_1, window_bounds = array<i64: 1, 8, 256>}, {transform_indices = @transform_2, window_bounds = array<i64: 1, 4, 256>}, {transform_indices = @transform_3, window_bounds = array<i64: 1, 16, 256>}]} {
    %c0 = arith.constant 0 : index
    %c0_0 = arith.constant 0 : index
    %c0_1 = arith.constant 0 : index
    %0 = vector.load %arg2[%c0, %c0_0, %c0_1] : memref<1x4x256xf32, #tpu.memory_space<vmem>>, vector<1x4x256xf32>
    %c0_2 = arith.constant 0 : index
    %c0_3 = arith.constant 0 : index
    %c0_4 = arith.constant 0 : index
    %1 = vector.load %arg5[%c0_2, %c0_3, %c0_4] : memref<1x16x256xf32, #tpu.memory_space<vmem>>, vector<1x4x256xf32>
    tpu.vector_store %arg5[%c0_2, %c0_3, %c0_4], %0 {strides = array<i32>} : memref<1x16x256xf32, #tpu.memory_space<vmem>>, vector<1x4x256xf32>,
    %c0_5 = arith.constant 0 : index
    %c0_6 = arith.constant 0 : index
    %c0_7 = arith.constant 0 : index
    %2 = vector.load %arg3[%c0_5, %c0_6, %c0_7] : memref<1x8x256xf32, #tpu.memory_space<vmem>>, vector<1x8x256xf32>
    %c0_8 = arith.constant 0 : index
    %c4 = arith.constant 4 : index
    %c0_9 = arith.constant 0 : index
    %3 = vector.load %arg5[%c0_8, %c4, %c0_9] : memref<1x16x256xf32, #tpu.memory_space<vmem>>, vector<1x8x256xf32>
    tpu.vector_store %arg5[%c0_8, %c4, %c0_9], %2 {strides = array<i32>} : memref<1x16x256xf32, #tpu.memory_space<vmem>>, vector<1x8x256xf32>,
    %c0_10 = arith.constant 0 : index
    %c0_11 = arith.constant 0 : index
    %c0_12 = arith.constant 0 : index
    %4 = vector.load %arg4[%c0_10, %c0_11, %c0_12] : memref<1x4x256xf32, #tpu.memory_space<vmem>>, vector<1x4x256xf32>
    %c0_13 = arith.constant 0 : index
    %c12 = arith.constant 12 : index
    %c0_14 = arith.constant 0 : index
    %5 = vector.load %arg5[%c0_13, %c12, %c0_14] : memref<1x16x256xf32, #tpu.memory_space<vmem>>, vector<1x4x256xf32>
    tpu.vector_store %arg5[%c0_13, %c12, %c0_14], %4 {strides = array<i32>} : memref<1x16x256xf32, #tpu.memory_space<vmem>>, vector<1x4x256xf32>,
    return
  }
  func.func @transform_0(%arg0: i32, %arg1: i32) -> (i32, i32, i32) {
    %c0_i32 = arith.constant 0 : i32
    %c0_i32_0 = arith.constant 0 : i32
    return %arg0, %c0_i32, %arg1 : i32, i32, i32
  }
  func.func @transform_1(%arg0: i32, %arg1: i32) -> (i32, i32, i32) {
    %c0_i32 = arith.constant 0 : i32
    %c0_i32_0 = arith.constant 0 : i32
    return %arg0, %c0_i32, %arg1 : i32, i32, i32
  }
  func.func @transform_2(%arg0: i32, %arg1: i32) -> (i32, i32, i32) {
    %c0_i32 = arith.constant 0 : i32
    %c0_i32_0 = arith.constant 0 : i32
    return %arg0, %c0_i32, %arg1 : i32, i32, i32
  }
  func.func @transform_3(%arg0: i32, %arg1: i32) -> (i32, i32, i32) {
    %c0_i32 = arith.constant 0 : i32
    %c0_i32_0 = arith.constant 0 : i32
    return %arg0, %c0_i32, %arg1 : i32, i32, i32
  }
}

</mosaic_0001>

<llo_original>
// kernel: tpu_custom_call.1
$region0: #{tpu_custom_call.1}
  #allocation0 [shape = 'u32[]', space=smem, size = 0x4, offset = 0x4, fixed_abs, tag = 'smem constant byte address 0x4 - core index']
  #allocation1 [shape = 'u32[144,128]{1,0:T(1,128)}', space=vmem, size = 0x12000, scoped, tag = 'internal scratch']
  %s0 = inlined_call_operand.hbm [shape: f32[2,4,256], index: 0, kind: input, shape index: {}]
  %s1 = inlined_call_operand.hbm [shape: f32[2,8,256], index: 1, kind: input, shape index: {}]
  %s2 = inlined_call_operand.hbm [shape: f32[2,4,256], index: 2, kind: input, shape index: {}]
  %s3 = inlined_call_operand.hbm [shape: f32[2,16,256], index: 3, kind: output, shape index: {}]
  %s4 = sld [smem:[#allocation0]]
  $region57: #{tpu_custom_call.1} parent=0
    _
  %s6 = ssub.s32 1, %s4
  %s7 = scalar_select 0, %s6, %s4
  $region1: #{tpu_custom_call.1} parent=0
    #allocation2 [shape = 'u8[8192]{0}', space=vmem, size = 0x2000, scoped, tag = 'input window, operand 0']
    #allocation3 [shape = 's32[2]{0}', space=sflag, size = 0x8, scoped, tag = 'scoped memory for tpu_custom_call.1']
    #allocation4 [shape = 's32[2]{0}', space=sflag, size = 0x8, scoped, tag = 'scoped memory for tpu_custom_call.1']
    #allocation5 [shape = 'u8[16384]{0}', space=vmem, size = 0x4000, scoped, tag = 'input window, operand 1']
    #allocation6 [shape = 's32[2]{0}', space=sflag, size = 0x8, scoped, tag = 'scoped memory for tpu_custom_call.1']
    #allocation7 [shape = 'u8[8192]{0}', space=vmem, size = 0x2000, scoped, tag = 'input window, operand 2']
    #allocation8 [shape = 'u8[32768]{0}', space=vmem, size = 0x8000, scoped, tag = 'output window, operand 0']
    %8 = vsyncpa [#allocation3], 0
    %s9 = scalar_lea.sflag [#allocation3], 1
    %10 = vsyncpa %s9, 0
    %11 = vsyncpa [#allocation6], 0
    %s12 = scalar_lea.sflag [#allocation6], 1
    %13 = vsyncpa %s12, 0
    %14 = vsyncpa [#allocation4], 0
    %s15 = scalar_lea.sflag [#allocation4], 1
    %16 = vsyncpa %s15, 0
    loop: start=0, step=1, limit=4
    $region2: #{tpu_custom_call.1} parent=1 // loop_pre_header
      _
    $region3: #{tpu_custom_call.1} parent=1 // loop_header
      %s18 = sphi 0, %s22
      %p19 = scmp.ge.s32.totalorder %s18, 4
      %s25 = sphi 0, %s37
      %s26 = sphi 0, %s33
      %s27 = sphi 0, %s25
      %s28 = sphi 0, %s26
      %s29 = sphi 0, %s27
      %s30 = sphi 0, %s28
      %s42 = sphi 0, %s44
      %s45 = sphi 0, %s42
      %s46 = sphi 0, %s45
      %s62 = sphi 0, %s46
      %s70 = sphi 0, %s72
      %s73 = sphi 0, %s70
      %s74 = sphi 0, %s73
      %s90 = sphi 0, %s74
      %s98 = sphi 0, %s100
      %s101 = sphi 0, %s98
      %s102 = sphi 0, %s101
      %s118 = sphi 0, %s102
      %s126 = sphi 0, %s128
      %s129 = sphi 0, %s126
      %s130 = sphi 0, %s129
      %s146 = sphi 0, %s130
    $region4: #{tpu_custom_call.1} parent=1 // loop_header_branch
      %21 = sbr.rel (%p19) target = $region8
    $region5: #{tpu_custom_call.1} parent=1 // loop_body
      %s23 = ssub.s32 %s18, 1
      %s24 = ssub.s32 %s18, 2
      %s31 = sadd.s32 1, %s26
      %p32 = scmp.ge.s32.totalorder %s31, 1
      %s33 = scalar_select %p32, 0, %s31
      %s34 = sadd.s32 1, %s25
      %s35 = scalar_select %p32, %s34, %s25
      %p36 = scmp.ge.s32.totalorder %s35, 2
      %s37 = scalar_select %p36, 0, %s35
      %s38 = ssub.s32 %s25, %s37
      %s39 = ssub.s32 %s26, %s33
      %s40 = sor.u32 %s38, %s39
      %p41 = scmp.eq.s32.totalorder %s40, 0
      %s43 = sadd.s32 %s42, 1
      %s44 = scalar_select %p41, %s42, %s43
      %p47 = pneg %p41
      %p48 = scmp.eq.s32.totalorder %s18, 1
      %p49 = por %p47, %p48
      %p50 = scmp.ne.s32.totalorder %s42, %s45
      %p51 = scmp.eq.s32.totalorder %s18, 0
      %p52 = por %p50, %p51
      %p53 = scmp.ne.s32.totalorder %s42, %s45
      %p54 = scmp.eq.s32.totalorder %s23, 1
      %p55 = por %p53, %p54
      %p56 = scmp.ne.s32.totalorder %s45, %s46
      %p57 = scmp.eq.s32.totalorder %s23, 0
      %p58 = por %p56, %p57
      %p59 = scmp.ne.s32.totalorder %s45, %s46
      %p60 = scmp.eq.s32.totalorder %s24, 1
      %p61 = por %p59, %p60
      %p63 = scmp.ne.s32.totalorder %s46, %s62
      %p64 = scmp.eq.s32.totalorder %s24, 0
      %p65 = por %p63, %p64
      %s66 = ssub.s32 %s25, %s37
      %s67 = ssub.s32 %s26, %s33
      %s68 = sor.u32 %s66, %s67
      %p69 = scmp.eq.s32.totalorder %s68, 0
      %s71 = sadd.s32 %s70, 1
      %s72 = scalar_select %p69, %s70, %s71
      %p75 = pneg %p69
      %p76 = scmp.eq.s32.totalorder %s18, 1
      %p77 = por %p75, %p76
      %p78 = scmp.ne.s32.totalorder %s70, %s73
      %p79 = scmp.eq.s32.totalorder %s18, 0
      %p80 = por %p78, %p79
      %p81 = scmp.ne.s32.totalorder %s70, %s73
      %p82 = scmp.eq.s32.totalorder %s23, 1
      %p83 = por %p81, %p82
      %p84 = scmp.ne.s32.totalorder %s73, %s74
      %p85 = scmp.eq.s32.totalorder %s23, 0
      %p86 = por %p84, %p85
      %p87 = scmp.ne.s32.totalorder %s73, %s74
      %p88 = scmp.eq.s32.totalorder %s24, 1
      %p89 = por %p87, %p88
      %p91 = scmp.ne.s32.totalorder %s74, %s90
      %p92 = scmp.eq.s32.totalorder %s24, 0
      %p93 = por %p91, %p92
      %s94 = ssub.s32 %s25, %s37
      %s95 = ssub.s32 %s26, %s33
      %s96 = sor.u32 %s94, %s95
      %p97 = scmp.eq.s32.totalorder %s96, 0
      %s99 = sadd.s32 %s98, 1
      %s100 = scalar_select %p97, %s98, %s99
      %p103 = pneg %p97
      %p104 = scmp.eq.s32.totalorder %s18, 1
      %p105 = por %p103, %p104
      %p106 = scmp.ne.s32.totalorder %s98, %s101
      %p107 = scmp.eq.s32.totalorder %s18, 0
      %p108 = por %p106, %p107
      %p109 = scmp.ne.s32.totalorder %s98, %s101
      %p110 = scmp.eq.s32.totalorder %s23, 1
      %p111 = por %p109, %p110
      %p112 = scmp.ne.s32.totalorder %s101, %s102
      %p113 = scmp.eq.s32.totalorder %s23, 0
      %p114 = por %p112, %p113
      %p115 = scmp.ne.s32.totalorder %s101, %s102
      %p116 = scmp.eq.s32.totalorder %s24, 1
      %p117 = por %p115, %p116
      %p119 = scmp.ne.s32.totalorder %s102, %s118
      %p120 = scmp.eq.s32.totalorder %s24, 0
      %p121 = por %p119, %p120
      %s122 = ssub.s32 %s25, %s37
      %s123 = ssub.s32 %s26, %s33
      %s124 = sor.u32 %s122, %s123
      %p125 = scmp.eq.s32.totalorder %s124, 0
      %s127 = sadd.s32 %s126, 1
      %s128 = scalar_select %p125, %s126, %s127
      %p131 = pneg %p125
      %p132 = scmp.eq.s32.totalorder %s18, 1
      %p133 = por %p131, %p132
      %p134 = scmp.ne.s32.totalorder %s126, %s129
      %p135 = scmp.eq.s32.totalorder %s18, 0
      %p136 = por %p134, %p135
      %p137 = scmp.ne.s32.totalorder %s126, %s129
      %p138 = scmp.eq.s32.totalorder %s23, 1
      %p139 = por %p137, %p138
      %p140 = scmp.ne.s32.totalorder %s129, %s130
      %p141 = scmp.eq.s32.totalorder %s23, 0
      %p142 = por %p140, %p141
      %p143 = scmp.ne.s32.totalorder %s129, %s130
      %p144 = scmp.eq.s32.totalorder %s24, 1
      %p145 = por %p143, %p144
      %p147 = scmp.ne.s32.totalorder %s130, %s146
      %p148 = scmp.eq.s32.totalorder %s24, 0
      %p149 = por %p147, %p148
      %p150 = scmp.le.s32.totalorder 1, %s18
      %p151 = scmp.lt.s32.totalorder %s18, 3
      %p152 = pnand %p150, %p151
      %p153 = pneg %p152
      // Predicated region
      $region9: #{tpu_custom_call.1} parent=5 // pred_check
        _
      $region10: #{tpu_custom_call.1} parent=5 // pred_check_branch
        %155 = sbr.rel (%p152) target = $region12
      $region11: #{tpu_custom_call.1} parent=5 // pred_region
        %s156 = ssub.s32 %s18, 1
      $region12: #{tpu_custom_call.1} parent=5 // pred_fallthru
        _
      %p157 = scmp.lt.s32.totalorder %s18, 2
      // Predicated region
      $region13: #{tpu_custom_call.1} parent=5 // pred_check
        %p158 = pneg %p157
      $region14: #{tpu_custom_call.1} parent=5 // pred_check_branch
        %160 = sbr.rel (%p158) target = $region16
      $region15: #{tpu_custom_call.1} parent=5 // pred_region
        // Predicated region
        $region17: #{tpu_custom_call.1} parent=15 // pred_check
          %p161 = pneg %p52
        $region18: #{tpu_custom_call.1} parent=15 // pred_check_branch
          %163 = sbr.rel (%p161) target = $region20
        $region19: #{tpu_custom_call.1} parent=15 // pred_region
          %s164 = sand.u32 %s42, 1
          %s165 = scalar_lea.sflag [#allocation3], %s164
          %s166 = sand.u32 %s42, 1
          %s167 = smul.addr %s166, 8
          %s168 = scalar_lea.vmem [#allocation2], %s167
          %s169 = smul.u32 2, %s26
          %s171 = ssub.s32 128, 128
          %172 = vsyncadd %s165, %s171
          %s173 = smul.addr %s25, 2
          %s174 = sadd.s32 %s169, %s173
          %s175 = smul.addr %s174, 64
          %s176 = scalar_lea.hbm %s0, %s175
          %s178 = sshll.u32 %s168, 4
          %s179 = int_to_ptr.vmem [resolvable:$true] %s178
          %181 = dma.hbm_to_vmem [thread:$0]  %s176, 128, %s179, %s165
        $region20: #{tpu_custom_call.1} parent=15 // pred_fallthru
          _
        // Predicated region
        $region21: #{tpu_custom_call.1} parent=15 // pred_check
          %p182 = pneg %p80
        $region22: #{tpu_custom_call.1} parent=15 // pred_check_branch
          %184 = sbr.rel (%p182) target = $region24
        $region23: #{tpu_custom_call.1} parent=15 // pred_region
          %s185 = sand.u32 %s18, 1
          %s186 = scalar_lea.sflag [#allocation6], %s185
          %s187 = sand.u32 %s70, 1
          %s188 = smul.addr %s187, 16
          %s189 = scalar_lea.vmem [#allocation5], %s188
          %s190 = smul.u32 2, %s26
          %s192 = ssub.s32 256, 256
          %193 = vsyncadd %s186, %s192
          %s194 = smul.addr %s25, 2
          %s195 = sadd.s32 %s190, %s194
          %s196 = smul.addr %s195, 128
          %s197 = scalar_lea.hbm %s1, %s196
          %s199 = sshll.u32 %s189, 4
          %s200 = int_to_ptr.vmem [resolvable:$true] %s199
          %202 = dma.hbm_to_vmem [thread:$0]  %s197, 256, %s200, %s186
        $region24: #{tpu_custom_call.1} parent=15 // pred_fallthru
          _
        // Predicated region
        $region25: #{tpu_custom_call.1} parent=15 // pred_check
          %p203 = pneg %p108
        $region26: #{tpu_custom_call.1} parent=15 // pred_check_branch
          %205 = sbr.rel (%p203) target = $region28
        $region27: #{tpu_custom_call.1} parent=15 // pred_region
          %s206 = sand.u32 %s18, 1
          %s207 = scalar_lea.sflag [#allocation6], %s206
          %s208 = sand.u32 %s98, 1
          %s209 = smul.addr %s208, 8
          %s210 = scalar_lea.vmem [#allocation7], %s209
          %s211 = smul.u32 2, %s26
          %s213 = ssub.s32 128, 128
          %214 = vsyncadd %s207, %s213
          %s215 = smul.addr %s25, 2
          %s216 = sadd.s32 %s211, %s215
          %s217 = smul.addr %s216, 64
          %s218 = scalar_lea.hbm %s2, %s217
          %s220 = sshll.u32 %s210, 4
          %s221 = int_to_ptr.vmem [resolvable:$true] %s220
          %223 = dma.hbm_to_vmem [thread:$0]  %s218, 128, %s221, %s207
        $region28: #{tpu_custom_call.1} parent=15 // pred_fallthru
          _
      $region16: #{tpu_custom_call.1} parent=5 // pred_fallthru
        _
      %p224 = scmp.le.s32.totalorder 1, %s18
      %p225 = scmp.lt.s32.totalorder %s18, 3
      %p226 = pnand %p224, %p225
      %p227 = pneg %p226
      // Predicated region
      $region29: #{tpu_custom_call.1} parent=5 // pred_check
        _
      $region30: #{tpu_custom_call.1} parent=5 // pred_check_branch
        %229 = sbr.rel (%p226) target = $region32
      $region31: #{tpu_custom_call.1} parent=5 // pred_region
        %s230 = ssub.s32 %s18, 1
        %s231 = sand.u32 %s45, 1
        %s232 = scalar_lea.sflag [#allocation3], %s231
        %s233 = sand.u32 %s45, 1
        %s234 = smul.addr %s233, 8
        %s235 = scalar_lea.vmem [#allocation2], %s234
        // Predicated region
        $region33: #{tpu_custom_call.1} parent=31 // pred_check
          %p236 = pneg %p58
        $region34: #{tpu_custom_call.1} parent=31 // pred_check_branch
          %238 = sbr.rel (%p236) target = $region36
        $region35: #{tpu_custom_call.1} parent=31 // pred_region
          %239 = dma.done %s232, 128
        $region36: #{tpu_custom_call.1} parent=31 // pred_fallthru
          _
        %s240 = sand.u32 %s23, 1
        %s241 = scalar_lea.sflag [#allocation6], %s240
        %s242 = sand.u32 %s73, 1
        %s243 = smul.addr %s242, 16
        %s244 = scalar_lea.vmem [#allocation5], %s243
        // Predicated region
        $region37: #{tpu_custom_call.1} parent=31 // pred_check
          %p245 = pneg %p86
        $region38: #{tpu_custom_call.1} parent=31 // pred_check_branch
          %247 = sbr.rel (%p245) target = $region40
        $region39: #{tpu_custom_call.1} parent=31 // pred_region
          %248 = dma.done %s241, 256
        $region40: #{tpu_custom_call.1} parent=31 // pred_fallthru
          _
        %s249 = sand.u32 %s23, 1
        %s250 = scalar_lea.sflag [#allocation6], %s249
        %s251 = sand.u32 %s101, 1
        %s252 = smul.addr %s251, 8
        %s253 = scalar_lea.vmem [#allocation7], %s252
        // Predicated region
        $region41: #{tpu_custom_call.1} parent=31 // pred_check
          %p254 = pneg %p114
        $region42: #{tpu_custom_call.1} parent=31 // pred_check_branch
          %256 = sbr.rel (%p254) target = $region44
        $region43: #{tpu_custom_call.1} parent=31 // pred_region
          %257 = dma.done %s250, 128
        $region44: #{tpu_custom_call.1} parent=31 // pred_fallthru
          _
        %s258 = sand.u32 %s45, 1
        %s259 = scalar_lea.sflag [#allocation3], %s258
        %s260 = sand.u32 %s45, 1
        %s261 = smul.addr %s260, 8
        %s262 = scalar_lea.vmem [#allocation2], %s261
        %p263 = pneg %p58
        %p264 = pneg %p55
        %s265 = sand.u32 %s23, 1
        %s266 = scalar_lea.sflag [#allocation6], %s265
        %s267 = sand.u32 %s73, 1
        %s268 = smul.addr %s267, 16
        %s269 = scalar_lea.vmem [#allocation5], %s268
        %p270 = pneg %p86
        %p271 = pneg %p83
        %s272 = sand.u32 %s23, 1
        %s273 = scalar_lea.sflag [#allocation6], %s272
        %s274 = sand.u32 %s101, 1
        %s275 = smul.addr %s274, 8
        %s276 = scalar_lea.vmem [#allocation7], %s275
        %p277 = pneg %p114
        %p278 = pneg %p111
        %p279 = pneg %p142
        %p280 = pneg %p139
        %s281 = sand.u32 %s129, 1
        %s282 = scalar_lea.sflag [#allocation4], %s281
        %s283 = sand.u32 %s129, 1
        %s284 = smul.addr %s283, 32
        %s285 = scalar_lea.vmem [#allocation8], %s284
        %s286 = smul.u32 2, %s28
        %s287 = smul.u32 2, %s28
        %s288 = smul.u32 2, %s28
        %s289 = smul.u32 2, %s28
        %v290 = vld [vmem:[%s235] sm:$0xff]
        %v292 = vcombine.high %v290, %v290
        %294 = vst [vmem:[%s285] sm:$0xf] %v290
        %295 = vst [vmem:[%s285 + $0x8] sm:$0xf] %v292
        %v296 = vld [vmem:[%s244] sm:$0xff]
        %v297 = vld [vmem:[%s244 + $0x8] sm:$0xff]
        %v300 = vrot.slane %v296, 4
        %v301 = vrot.slane %v297, 4
        %304 = vst [vmem:[%s285] sm:$0xf0] %v300
        %305 = vst [vmem:[%s285 + $0x8] sm:$0xf0] %v301
        %306 = vst [vmem:[%s285 + $0x10] sm:$0xf] %v300
        %307 = vst [vmem:[%s285 + $0x18] sm:$0xf] %v301
        %v308 = vld [vmem:[%s253] sm:$0xff]
        %v310 = vcombine.low %v308, %v308
        %312 = vst [vmem:[%s285 + $0x10] sm:$0xf0] %v310
        %313 = vst [vmem:[%s285 + $0x18] sm:$0xf0] %v308
        %s314 = sand.u32 %s129, 1
        %s315 = scalar_lea.sflag [#allocation4], %s314
        %s316 = sand.u32 %s129, 1
        %s317 = smul.addr %s316, 32
        %s318 = scalar_lea.vmem [#allocation8], %s317
        // Predicated region
        $region45: #{tpu_custom_call.1} parent=31 // pred_check
          %p319 = pneg %p139
        $region46: #{tpu_custom_call.1} parent=31 // pred_check_branch
          %321 = sbr.rel (%p319) target = $region48
        $region47: #{tpu_custom_call.1} parent=31 // pred_region
          %s322 = smul.u32 2, %s28
          %s324 = ssub.s32 512, 512
          %325 = vsyncadd %s315, %s324
          %s326 = smul.addr %s27, 4
          %s327 = sadd.s32 %s322, %s326
          %s328 = smul.addr %s327, 128
          %s329 = scalar_lea.hbm %s3, %s328
          %s330 = sshll.u32 %s318, 4
          %s331 = int_to_ptr.vmem [resolvable:$true] %s330
          %336 = dma.vmem_to_hbm [thread:$0]  %s331, 512, %s329, %s315, 256, 256, 16
        $region48: #{tpu_custom_call.1} parent=31 // pred_fallthru
          _
      $region32: #{tpu_custom_call.1} parent=5 // pred_fallthru
        _
      %p337 = scmp.le.s32.totalorder 2, %s18
      // Predicated region
      $region49: #{tpu_custom_call.1} parent=5 // pred_check
        %p338 = pneg %p337
      $region50: #{tpu_custom_call.1} parent=5 // pred_check_branch
        %340 = sbr.rel (%p338) target = $region52
      $region51: #{tpu_custom_call.1} parent=5 // pred_region
        %s341 = ssub.s32 %s18, 2
        // Predicated region
        $region53: #{tpu_custom_call.1} parent=51 // pred_check
          %p342 = pneg %p145
        $region54: #{tpu_custom_call.1} parent=51 // pred_check_branch
          %344 = sbr.rel (%p342) target = $region56
        $region55: #{tpu_custom_call.1} parent=51 // pred_region
          %s345 = sand.u32 %s130, 1
          %s346 = scalar_lea.sflag [#allocation4], %s345
          %s347 = sand.u32 %s130, 1
          %s348 = smul.addr %s347, 32
          %s349 = scalar_lea.vmem [#allocation8], %s348
          %350 = dma.done %s346, 512
        $region56: #{tpu_custom_call.1} parent=51 // pred_fallthru
          _
      $region52: #{tpu_custom_call.1} parent=5 // pred_fallthru
        _
    $region6: #{tpu_custom_call.1} parent=1 // loop_footer
      %s22 = sadd.s32 1, %s18
    $region7: #{tpu_custom_call.1} parent=1 // loop_footer_branch
      %17 = sbr.rel target = $region3
    $region8: #{tpu_custom_call.1} parent=1 // loop_exit
      _
    %351 = vsyncpa [#allocation3], 1
    %s352 = scalar_lea.sflag [#allocation3], 1
    %353 = vsyncpa %s352, 1
    %354 = vsyncpa [#allocation6], 1
    %s355 = scalar_lea.sflag [#allocation6], 1
    %356 = vsyncpa %s355, 1
    %357 = vsyncpa [#allocation4], 1
    %s358 = scalar_lea.sflag [#allocation4], 1
    %359 = vsyncpa %s358, 1

</llo_original>
